<compile_context>
chip_gen: v6e
topology: v6e:2x2x1
jax: 0.10.0
libtpu: 0.0.40
codegen_flags: <defaults>
</compile_context>

<pallas_src>
import functools

import jax
import jax.numpy as jnp
from jax.experimental import pallas as pl
from jax.experimental.pallas import tpu as pltpu


def _soft_xent_contrib(x, t):
    """Per-position -softmax(t) . log_softmax(x), reduced over channel axis 0.

    x, t: (C, ...) float32 logits.  Returns shape (1, ...).
    """
    x_max = jnp.max(x, axis=0, keepdims=True)
    x_sh = x - x_max
    x_lse = jnp.log(jnp.sum(jnp.exp(x_sh), axis=0, keepdims=True))
    t_exp = jnp.exp(t - jnp.max(t, axis=0, keepdims=True))
    t_sum = jnp.sum(t_exp, axis=0, keepdims=True)
    weighted = jnp.sum(t_exp * x_sh, axis=0, keepdims=True)
    # approx=True was considered (EUP slot) but kept exact: the loss is a large
    # sum and the test tolerance is tight; the divide is 1/C of the element work.
    return x_lse - weighted * pl.reciprocal(t_sum, approx=False)


def _soft_entropy_kernel_spatial(x_ref, t_ref, o_ref, *, rows, ts, ragged_tail):
    """Main path: blocks are (1, C, ts, 128); channels on a major axis."""

    def emit(valid):
        x = x_ref[0].astype(jnp.float32)  # (C, ts, 128)
        t = t_ref[0].astype(jnp.float32)
        if valid is not None:
            # Select (not multiply) before exp so undefined tail data in a
            # partially out-of-bounds block can never produce inf/NaN.
            x = jnp.where(valid, x, 0.0)
            t = jnp.where(valid, t, 0.0)
        contrib = _soft_xent_contrib(x, t)  # (1, ts, 128)
        if valid is not None:
            contrib = jnp.where(valid, contrib, 0.0)
        # Per-tile partial sum over the row (sublane) axis: (1, 128).
        o_ref[0, 0] = jnp.sum(contrib, axis=1)

    if not ragged_tail:
        emit(None)
    else:
        j = pl.program_id(1)
        last = pl.num_programs(1) - 1

        @pl.when(j < last)
        def _full_tile():
            emit(None)

        @pl.when(j == last)
        def _tail_tile():
            row = j * ts + jax.lax.broadcasted_iota(jnp.int32, (ts, 128), 0)
            emit(row < rows)


def _soft_entropy_kernel_flat(x_ref, t_ref, o_ref, *, hw, tl):
    """Fallback path (HW % 128 != 0): blocks are (1, C, tl), lane-tiled."""
    j = pl.program_id(1)
    last = pl.num_programs(1) - 1

    @pl.when(j == 0)
    def _init():
        o_ref[...] = jnp.zeros_like(o_ref)

    def emit(valid):
        x = x_ref[0].astype(jnp.float32)  # (C, tl)
        t = t_ref[0].astype(jnp.float32)
        if valid is not None:
            x = jnp.where(valid, x, 0.0)
            t = jnp.where(valid, t, 0.0)
        contrib = _soft_xent_contrib(x, t)  # (1, tl)
        if valid is not None:
            contrib = jnp.where(valid, contrib, 0.0)
        o_ref[0] += contrib

    @pl.when(j < last)
    def _full_tile():
        emit(None)

    @pl.when(j == last)
    def _tail_tile():
        lane = j * tl + jax.lax.broadcasted_iota(jnp.int32, (1, tl), 1)
        emit(lane < hw)


def _round_up(x: int, m: int) -> int:
    return (x + m - 1) // m * m


def soft_entropy(inputs, targets):
    """SoftEntropy loss. inputs/targets: (B, C, H, W) logits (NCHW)."""
    assert inputs.shape == targets.shape
    B, C, H, W = inputs.shape
    HW = H * W
    itemsize = inputs.dtype.itemsize

    # Per-generation VMEM limit: half of physical, capped at 64 MiB
    # (v5e/v6e: 64 MiB of 128 MiB; v7x: 32 MiB of 64 MiB).
    try:
        vmem_cap = int(getattr(pltpu.get_tpu_info(), "vmem_capacity_bytes",
                               64 * 1024 * 1024))
    except Exception:
        vmem_cap = 64 * 1024 * 1024
    vmem_limit = min(vmem_cap // 2, 64 * 1024 * 1024)
    budget = int(vmem_limit * 0.85)  # leave headroom for Mosaic internals

    if HW % 128 == 0:
        # ---- Main path: channels on a major axis, spatial fills (TS, 128). ----
        rows = HW // 128
        x = inputs.reshape(B, C, rows, 128)   # free, contiguous reshape
        t = targets.reshape(B, C, rows, 128)

        # Footprint per row-tile-of-128-lanes: 2 inputs x 2 pipeline buffers of
        # the input dtype + ~5 f32-sized elementwise temporaries.
        per_row_bytes = C * 128 * (4 * itemsize + 5 * 4)
        ts_budget = max(8, (budget // per_row_bytes) // 8 * 8)
        ts = rows if rows <= ts_budget else ts_budget
        n_tiles = pl.cdiv(rows, ts)
        ragged = (rows % ts) != 0

        # Large-C guard: if one pipelined step exceeds the default cap, raise
        # the limit toward physical VMEM instead of silently overshooting.
        step_bytes = C * ts * 128 * (4 * itemsize + 5 * 4)
        if step_bytes > vmem_limit:
            vmem_limit = min(step_bytes + (4 << 20), (vmem_cap * 7) // 8)
        # TODO(synk): for very large C (classification heads) add a channel-split
        # grid axis with online-softmax accumulation instead of one huge block.

        kernel = functools.partial(
            _soft_entropy_kernel_spatial, rows=rows, ts=ts, ragged_tail=ragged)

        partials = pl.pallas_call(
            kernel,
            out_shape=jax.ShapeDtypeStruct((B, n_tiles, 1, 128), jnp.float32),
            grid=(B, n_tiles),
            in_specs=[
                pl.BlockSpec((1, C, ts, 128), lambda b, j: (b, 0, j, 0)),
                pl.BlockSpec((1, C, ts, 128), lambda b, j: (b, 0, j, 0)),
            ],
            out_specs=pl.BlockSpec((1, 1, 1, 128), lambda b, j: (b, j, 0, 0)),
            compiler_params=pltpu.CompilerParams(
                # No reduction axis -> every grid step is independent; both axes
                # parallel so the v7x megacore has work even when B == 1.
                dimension_semantics=("parallel", "parallel"),
                vmem_limit_bytes=vmem_limit,
            ),
        )(x, t)
    else:
        # ---- Fallback path: (B, C, HW) with lane tiling + tail masking. ----
        x = inputs.reshape(B, C, HW)
        t = targets.reshape(B, C, HW)

        c_pad = _round_up(max(C, 1), 8)  # sublane padding of the (C, tl) layout
        per_lane_bytes = c_pad * (4 * itemsize + 5 * 4) + 8  # + f32 out block x2
        tl = max(128, (budget // per_lane_bytes) // 128 * 128)
        tl = min(tl, _round_up(HW, 128))
        n_tiles = pl.cdiv(HW, tl)

        kernel = functools.partial(_soft_entropy_kernel_flat, hw=HW, tl=tl)

        partials = pl.pallas_call(
            kernel,
            out_shape=jax.ShapeDtypeStruct((B, 1, tl), jnp.float32),
            grid=(B, n_tiles),
            in_specs=[
                pl.BlockSpec((1, C, tl), lambda b, j: (b, 0, j)),
                pl.BlockSpec((1, C, tl), lambda b, j: (b, 0, j)),
            ],
            out_specs=pl.BlockSpec((1, 1, tl), lambda b, j: (b, 0, 0)),
            compiler_params=pltpu.CompilerParams(
                dimension_semantics=("parallel", "arbitrary"),
                vmem_limit_bytes=vmem_limit,
            ),
        )(x, t)

    # Final tiny reduction + the .mean(0) normalization.
    return jnp.sum(partials) / B


def _reference(inputs, targets):
    log_probs = jax.nn.log_softmax(inputs, axis=1)
    p = jax.nn.softmax(targets, axis=1)
    return jnp.sum(jnp.mean(-p * log_probs, axis=0))


if __name__ == "__main__":
    key = jax.random.PRNGKey(0)
    k1, k2 = jax.random.split(key)
    B, C, H, W = 2, 4, 16, 16
    inputs = jax.random.normal(k1, (B, C, H, W), dtype=jnp.float32)
    targets = jax.random.normal(k2, (B, C, H, W), dtype=jnp.float32)

    loss = soft_entropy(inputs, targets)
    loss = jax.block_until_ready(loss)

    ref = jax.block_until_ready(_reference(inputs, targets))
    assert jnp.allclose(loss, ref, rtol=1e-5, atol=1e-4), (loss, ref)
    print("KERNEL_OK")
</pallas_src>

<mosaic_0001>
module attributes {stable_mosaic.version = 11 : i64} {
  func.func @_soft_entropy_kernel_spatial(%arg0: i32, %arg1: i32, %arg2: memref<1x4x2x128xf32, #tpu.memory_space<vmem>>, %arg3: memref<1x4x2x128xf32, #tpu.memory_space<vmem>>, %arg4: memref<1x1x1x128xf32, #tpu.memory_space<vmem>>) attributes {dimension_semantics = [#tpu.dimension_semantics<parallel>, #tpu.dimension_semantics<parallel>], iteration_bounds = array<i64: 2, 1>, scalar_prefetch = 0 : i64, scratch_operands = 0 : i64, tpu.core_type = #tpu.core_type<tc>, window_params = [{transform_indices = @transform_0, window_bounds = array<i64: 1, 4, 2, 128>}, {transform_indices = @transform_1, window_bounds = array<i64: 1, 4, 2, 128>}, {transform_indices = @transform_2, window_bounds = array<i64: 1, 1, 1, 128>}]} {
    %c0 = arith.constant 0 : index
    %c0_0 = arith.constant 0 : index
    %c0_1 = arith.constant 0 : index
    %c0_2 = arith.constant 0 : index
    %0 = vector.load %arg2[%c0, %c0_0, %c0_1, %c0_2] : memref<1x4x2x128xf32, #tpu.memory_space<vmem>>, vector<1x4x2x128xf32>
    %1 = vector.shape_cast %0 : vector<1x4x2x128xf32> to vector<4x2x128xf32>
    %c0_3 = arith.constant 0 : index
    %c0_4 = arith.constant 0 : index
    %c0_5 = arith.constant 0 : index
    %c0_6 = arith.constant 0 : index
    %2 = vector.load %arg3[%c0_3, %c0_4, %c0_5, %c0_6] : memref<1x4x2x128xf32, #tpu.memory_space<vmem>>, vector<1x4x2x128xf32>
    %3 = vector.shape_cast %2 : vector<1x4x2x128xf32> to vector<4x2x128xf32>
    %cst = arith.constant dense<0xFF800000> : vector<2x128xf32>
    %4 = vector.multi_reduction <maximumf>, %1, %cst [0] : vector<4x2x128xf32> to vector<2x128xf32>
    %5 = vector.shape_cast %4 : vector<2x128xf32> to vector<1x2x128xf32>
    %6 = vector.broadcast %5 : vector<1x2x128xf32> to vector<4x2x128xf32>
    %7 = arith.subf %1, %6 : vector<4x2x128xf32>
    %8 = math.exp %7 : vector<4x2x128xf32>
    %cst_7 = arith.constant dense<0.000000e+00> : vector<2x128xf32>
    %9 = vector.multi_reduction <add>, %8, %cst_7 [0] : vector<4x2x128xf32> to vector<2x128xf32>
    %10 = vector.shape_cast %9 : vector<2x128xf32> to vector<1x2x128xf32>
    %11 = math.log %10 : vector<1x2x128xf32>
    %cst_8 = arith.constant dense<0xFF800000> : vector<2x128xf32>
    %12 = vector.multi_reduction <maximumf>, %3, %cst_8 [0] : vector<4x2x128xf32> to vector<2x128xf32>
    %13 = vector.shape_cast %12 : vector<2x128xf32> to vector<1x2x128xf32>
    %14 = vector.broadcast %13 : vector<1x2x128xf32> to vector<4x2x128xf32>
    %15 = arith.subf %3, %14 : vector<4x2x128xf32>
    %16 = math.exp %15 : vector<4x2x128xf32>
    %cst_9 = arith.constant dense<0.000000e+00> : vector<2x128xf32>
    %17 = vector.multi_reduction <add>, %16, %cst_9 [0] : vector<4x2x128xf32> to vector<2x128xf32>
    %18 = vector.shape_cast %17 : vector<2x128xf32> to vector<1x2x128xf32>
    %19 = arith.mulf %16, %7 : vector<4x2x128xf32>
    %cst_10 = arith.constant dense<0.000000e+00> : vector<2x128xf32>
    %20 = vector.multi_reduction <add>, %19, %cst_10 [0] : vector<4x2x128xf32> to vector<2x128xf32>
    %21 = vector.shape_cast %20 : vector<2x128xf32> to vector<1x2x128xf32>
    %22 = tpu.reciprocal %18 : vector<1x2x128xf32> -> vector<1x2x128xf32>
    %23 = arith.mulf %21, %22 : vector<1x2x128xf32>
    %24 = arith.subf %11, %23 : vector<1x2x128xf32>
    %cst_11 = arith.constant dense<0.000000e+00> : vector<1x128xf32>
    %25 = vector.multi_reduction <add>, %24, %cst_11 [1] : vector<1x2x128xf32> to vector<1x128xf32>
    %c0_12 = arith.constant 0 : index
    %c0_13 = arith.constant 0 : index
    %c0_14 = arith.constant 0 : index
    %c0_15 = arith.constant 0 : index
    %26 = vector.load %arg4[%c0_12, %c0_13, %c0_14, %c0_15] : memref<1x1x1x128xf32, #tpu.memory_space<vmem>>, vector<1x1x1x128xf32>
    %27 = vector.shape_cast %26 : vector<1x1x1x128xf32> to vector<1x128xf32>
    %28 = vector.shape_cast %25 : vector<1x128xf32> to vector<1x1x1x128xf32>
    tpu.vector_store %arg4[%c0_12, %c0_13, %c0_14, %c0_15], %28 {strides = array<i32>} : memref<1x1x1x128xf32, #tpu.memory_space<vmem>>, vector<1x1x1x128xf32>,
    return
  }
  func.func @transform_0(%arg0: i32, %arg1: i32) -> (i32, i32, i32, i32) {
    %c0_i32 = arith.constant 0 : i32
    %c0_i32_0 = arith.constant 0 : i32
    %c0_i32_1 = arith.constant 0 : i32
    return %arg0, %c0_i32, %arg1, %c0_i32_0 : i32, i32, i32, i32
  }
  func.func @transform_1(%arg0: i32, %arg1: i32) -> (i32, i32, i32, i32) {
    %c0_i32 = arith.constant 0 : i32
    %c0_i32_0 = arith.constant 0 : i32
    %c0_i32_1 = arith.constant 0 : i32
    return %arg0, %c0_i32, %arg1, %c0_i32_0 : i32, i32, i32, i32
  }
  func.func @transform_2(%arg0: i32, %arg1: i32) -> (i32, i32, i32, i32) {
    %c0_i32 = arith.constant 0 : i32
    %c0_i32_0 = arith.constant 0 : i32
    %c0_i32_1 = arith.constant 0 : i32
    return %arg0, %arg1, %c0_i32, %c0_i32_0 : i32, i32, i32, i32
  }
}

</mosaic_0001>

<llo_original>
// kernel: tpu_custom_call.1
$region0: #{tpu_custom_call.1}
  #allocation0 [shape = 'u32[]', space=smem, size = 0x4, offset = 0x4, fixed_abs, tag = 'smem constant byte address 0x4 - core index']
  #allocation1 [shape = 'u32[144,128]{1,0:T(1,128)}', space=vmem, size = 0x12000, scoped, tag = 'internal scratch']
  %s0 = inlined_call_operand.hbm [shape: f32[2,4,2,128], index: 0, kind: input, shape index: {}]
  %s1 = inlined_call_operand.hbm [shape: f32[2,4,2,128], index: 1, kind: input, shape index: {}]
  %s2 = inlined_call_operand.hbm [shape: f32[2,1,1,128], index: 2, kind: output, shape index: {}]
  %s3 = sld [smem:[#allocation0]]
  $region49: #{tpu_custom_call.1} parent=0
    _
  %s5 = ssub.s32 1, %s3
  %s6 = scalar_select 0, %s5, %s3
  $region1: #{tpu_custom_call.1} parent=0
    #allocation2 [shape = 'u8[8192]{0}', space=vmem, size = 0x2000, scoped, tag = 'input window, operand 0']
    #allocation3 [shape = 's32[2]{0}', space=sflag, size = 0x8, scoped, tag = 'scoped memory for tpu_custom_call.1']
    #allocation4 [shape = 's32[2]{0}', space=sflag, size = 0x8, scoped, tag = 'scoped memory for tpu_custom_call.1']
    #allocation5 [shape = 'u8[8192]{0}', space=vmem, size = 0x2000, scoped, tag = 'input window, operand 1']
    #allocation6 [shape = 's32[2]{0}', space=sflag, size = 0x8, scoped, tag = 'scoped memory for tpu_custom_call.1']
    #allocation7 [shape = 'u8[1024]{0}', space=vmem, size = 0x400, scoped, tag = 'output window, operand 0']
    %7 = vsyncpa [#allocation3], 0
    %s8 = scalar_lea.sflag [#allocation3], 1
    %9 = vsyncpa %s8, 0
    %10 = vsyncpa [#allocation6], 0
    %s11 = scalar_lea.sflag [#allocation6], 1
    %12 = vsyncpa %s11, 0
    %13 = vsyncpa [#allocation4], 0
    %s14 = scalar_lea.sflag [#allocation4], 1
    %15 = vsyncpa %s14, 0
    loop: start=0, step=1, limit=4
    $region2: #{tpu_custom_call.1} parent=1 // loop_pre_header
      _
    $region3: #{tpu_custom_call.1} parent=1 // loop_header
      %s17 = sphi 0, %s21
      %p18 = scmp.ge.s32.totalorder %s17, 4
      %s24 = sphi 0, %s36
      %s25 = sphi 0, %s32
      %s26 = sphi 0, %s24
      %s27 = sphi 0, %s25
      %s28 = sphi 0, %s26
      %s29 = sphi 0, %s27
      %s41 = sphi 0, %s43
      %s44 = sphi 0, %s41
      %s45 = sphi 0, %s44
      %s61 = sphi 0, %s45
      %s69 = sphi 0, %s71
      %s72 = sphi 0, %s69
      %s73 = sphi 0, %s72
      %s89 = sphi 0, %s73
      %s97 = sphi 0, %s99
      %s100 = sphi 0, %s97
      %s101 = sphi 0, %s100
      %s117 = sphi 0, %s101
    $region4: #{tpu_custom_call.1} parent=1 // loop_header_branch
      %20 = sbr.rel (%p18) target = $region8
    $region5: #{tpu_custom_call.1} parent=1 // loop_body
      %s22 = ssub.s32 %s17, 1
      %s23 = ssub.s32 %s17, 2
      %s30 = sadd.s32 1, %s25
      %p31 = scmp.ge.s32.totalorder %s30, 1
      %s32 = scalar_select %p31, 0, %s30
      %s33 = sadd.s32 1, %s24
      %s34 = scalar_select %p31, %s33, %s24
      %p35 = scmp.ge.s32.totalorder %s34, 2
      %s36 = scalar_select %p35, 0, %s34
      %s37 = ssub.s32 %s24, %s36
      %s38 = ssub.s32 %s25, %s32
      %s39 = sor.u32 %s37, %s38
      %p40 = scmp.eq.s32.totalorder %s39, 0
      %s42 = sadd.s32 %s41, 1
      %s43 = scalar_select %p40, %s41, %s42
      %p46 = pneg %p40
      %p47 = scmp.eq.s32.totalorder %s17, 1
      %p48 = por %p46, %p47
      %p49 = scmp.ne.s32.totalorder %s41, %s44
      %p50 = scmp.eq.s32.totalorder %s17, 0
      %p51 = por %p49, %p50
      %p52 = scmp.ne.s32.totalorder %s41, %s44
      %p53 = scmp.eq.s32.totalorder %s22, 1
      %p54 = por %p52, %p53
      %p55 = scmp.ne.s32.totalorder %s44, %s45
      %p56 = scmp.eq.s32.totalorder %s22, 0
      %p57 = por %p55, %p56
      %p58 = scmp.ne.s32.totalorder %s44, %s45
      %p59 = scmp.eq.s32.totalorder %s23, 1
      %p60 = por %p58, %p59
      %p62 = scmp.ne.s32.totalorder %s45, %s61
      %p63 = scmp.eq.s32.totalorder %s23, 0
      %p64 = por %p62, %p63
      %s65 = ssub.s32 %s24, %s36
      %s66 = ssub.s32 %s25, %s32
      %s67 = sor.u32 %s65, %s66
      %p68 = scmp.eq.s32.totalorder %s67, 0
      %s70 = sadd.s32 %s69, 1
      %s71 = scalar_select %p68, %s69, %s70
      %p74 = pneg %p68
      %p75 = scmp.eq.s32.totalorder %s17, 1
      %p76 = por %p74, %p75
      %p77 = scmp.ne.s32.totalorder %s69, %s72
      %p78 = scmp.eq.s32.totalorder %s17, 0
      %p79 = por %p77, %p78
      %p80 = scmp.ne.s32.totalorder %s69, %s72
      %p81 = scmp.eq.s32.totalorder %s22, 1
      %p82 = por %p80, %p81
      %p83 = scmp.ne.s32.totalorder %s72, %s73
      %p84 = scmp.eq.s32.totalorder %s22, 0
      %p85 = por %p83, %p84
      %p86 = scmp.ne.s32.totalorder %s72, %s73
      %p87 = scmp.eq.s32.totalorder %s23, 1
      %p88 = por %p86, %p87
      %p90 = scmp.ne.s32.totalorder %s73, %s89
      %p91 = scmp.eq.s32.totalorder %s23, 0
      %p92 = por %p90, %p91
      %s93 = ssub.s32 %s24, %s36
      %s94 = ssub.s32 %s25, %s32
      %s95 = sor.u32 %s93, %s94
      %p96 = scmp.eq.s32.totalorder %s95, 0
      %s98 = sadd.s32 %s97, 1
      %s99 = scalar_select %p96, %s97, %s98
      %p102 = pneg %p96
      %p103 = scmp.eq.s32.totalorder %s17, 1
      %p104 = por %p102, %p103
      %p105 = scmp.ne.s32.totalorder %s97, %s100
      %p106 = scmp.eq.s32.totalorder %s17, 0
      %p107 = por %p105, %p106
      %p108 = scmp.ne.s32.totalorder %s97, %s100
      %p109 = scmp.eq.s32.totalorder %s22, 1
      %p110 = por %p108, %p109
      %p111 = scmp.ne.s32.totalorder %s100, %s101
      %p112 = scmp.eq.s32.totalorder %s22, 0
      %p113 = por %p111, %p112
      %p114 = scmp.ne.s32.totalorder %s100, %s101
      %p115 = scmp.eq.s32.totalorder %s23, 1
      %p116 = por %p114, %p115
      %p118 = scmp.ne.s32.totalorder %s101, %s117
      %p119 = scmp.eq.s32.totalorder %s23, 0
      %p120 = por %p118, %p119
      %p121 = scmp.le.s32.totalorder 1, %s17
      %p122 = scmp.lt.s32.totalorder %s17, 3
      %p123 = pnand %p121, %p122
      %p124 = pneg %p123
      // Predicated region
      $region9: #{tpu_custom_call.1} parent=5 // pred_check
        _
      $region10: #{tpu_custom_call.1} parent=5 // pred_check_branch
        %126 = sbr.rel (%p123) target = $region12
      $region11: #{tpu_custom_call.1} parent=5 // pred_region
        %s127 = ssub.s32 %s17, 1
      $region12: #{tpu_custom_call.1} parent=5 // pred_fallthru
        _
      %p128 = scmp.lt.s32.totalorder %s17, 2
      // Predicated region
      $region13: #{tpu_custom_call.1} parent=5 // pred_check
        %p129 = pneg %p128
      $region14: #{tpu_custom_call.1} parent=5 // pred_check_branch
        %131 = sbr.rel (%p129) target = $region16
      $region15: #{tpu_custom_call.1} parent=5 // pred_region
        // Predicated region
        $region17: #{tpu_custom_call.1} parent=15 // pred_check
          %p132 = pneg %p51
        $region18: #{tpu_custom_call.1} parent=15 // pred_check_branch
          %134 = sbr.rel (%p132) target = $region20
        $region19: #{tpu_custom_call.1} parent=15 // pred_region
          %s135 = sand.u32 %s41, 1
          %s136 = scalar_lea.sflag [#allocation3], %s135
          %s137 = sand.u32 %s41, 1
          %s138 = smul.addr %s137, 8
          %s139 = scalar_lea.vmem [#allocation2], %s138
          %s141 = ssub.s32 128, 128
          %142 = vsyncadd %s136, %s141
          %s143 = smul.addr %s24, 4
          %s144 = sadd.s32 %s25, %s143
          %s145 = smul.addr %s144, 32
          %s146 = scalar_lea.hbm %s0, %s145
          %s147 = sshll.u32 %s139, 4
          %s148 = int_to_ptr.vmem [resolvable:$true] %s147
          %153 = dma.hbm_to_vmem [thread:$0]  %s146, 128, %s148, %s136, 32, 32, 2
        $region20: #{tpu_custom_call.1} parent=15 // pred_fallthru
          _
        // Predicated region
        $region21: #{tpu_custom_call.1} parent=15 // pred_check
          %p154 = pneg %p79
        $region22: #{tpu_custom_call.1} parent=15 // pred_check_branch
          %156 = sbr.rel (%p154) target = $region24
        $region23: #{tpu_custom_call.1} parent=15 // pred_region
          %s157 = sand.u32 %s69, 1
          %s158 = scalar_lea.sflag [#allocation6], %s157
          %s159 = sand.u32 %s69, 1
          %s160 = smul.addr %s159, 8
          %s161 = scalar_lea.vmem [#allocation5], %s160
          %s163 = ssub.s32 128, 128
          %164 = vsyncadd %s158, %s163
          %s165 = smul.addr %s24, 4
          %s166 = sadd.s32 %s25, %s165
          %s167 = smul.addr %s166, 32
          %s168 = scalar_lea.hbm %s1, %s167
          %s169 = sshll.u32 %s161, 4
          %s170 = int_to_ptr.vmem [resolvable:$true] %s169
          %175 = dma.hbm_to_vmem [thread:$0]  %s168, 128, %s170, %s158, 32, 32, 2
        $region24: #{tpu_custom_call.1} parent=15 // pred_fallthru
          _
      $region16: #{tpu_custom_call.1} parent=5 // pred_fallthru
        _
      %p176 = scmp.le.s32.totalorder 1, %s17
      %p177 = scmp.lt.s32.totalorder %s17, 3
      %p178 = pnand %p176, %p177
      %p179 = pneg %p178
      // Predicated region
      $region25: #{tpu_custom_call.1} parent=5 // pred_check
        _
      $region26: #{tpu_custom_call.1} parent=5 // pred_check_branch
        %181 = sbr.rel (%p178) target = $region28
      $region27: #{tpu_custom_call.1} parent=5 // pred_region
        %s182 = ssub.s32 %s17, 1
        %s183 = sand.u32 %s44, 1
        %s184 = scalar_lea.sflag [#allocation3], %s183
        %s185 = sand.u32 %s44, 1
        %s186 = smul.addr %s185, 8
        %s187 = scalar_lea.vmem [#allocation2], %s186
        // Predicated region
        $region29: #{tpu_custom_call.1} parent=27 // pred_check
          %p188 = pneg %p57
        $region30: #{tpu_custom_call.1} parent=27 // pred_check_branch
          %190 = sbr.rel (%p188) target = $region32
        $region31: #{tpu_custom_call.1} parent=27 // pred_region
          %191 = dma.done %s184, 128
        $region32: #{tpu_custom_call.1} parent=27 // pred_fallthru
          _
        %s192 = sand.u32 %s72, 1
        %s193 = scalar_lea.sflag [#allocation6], %s192
        %s194 = sand.u32 %s72, 1
        %s195 = smul.addr %s194, 8
        %s196 = scalar_lea.vmem [#allocation5], %s195
        // Predicated region
        $region33: #{tpu_custom_call.1} parent=27 // pred_check
          %p197 = pneg %p85
        $region34: #{tpu_custom_call.1} parent=27 // pred_check_branch
          %199 = sbr.rel (%p197) target = $region36
        $region35: #{tpu_custom_call.1} parent=27 // pred_region
          %200 = dma.done %s193, 128
        $region36: #{tpu_custom_call.1} parent=27 // pred_fallthru
          _
        %s201 = sand.u32 %s44, 1
        %s202 = scalar_lea.sflag [#allocation3], %s201
        %s203 = sand.u32 %s44, 1
        %s204 = smul.addr %s203, 8
        %s205 = scalar_lea.vmem [#allocation2], %s204
        %p206 = pneg %p57
        %p207 = pneg %p54
        %s208 = sand.u32 %s72, 1
        %s209 = scalar_lea.sflag [#allocation6], %s208
        %s210 = sand.u32 %s72, 1
        %s211 = smul.addr %s210, 8
        %s212 = scalar_lea.vmem [#allocation5], %s211
        %p213 = pneg %p85
        %p214 = pneg %p82
        %p215 = pneg %p113
        %p216 = pneg %p110
        %s217 = sand.u32 %s100, 1
        %s218 = scalar_lea.sflag [#allocation4], %s217
        %s219 = sand.u32 %s100, 1
        %s220 = scalar_lea.vmem [#allocation7], %s219
        %v221 = vld [vmem:[%s187] sm:$0x3]
        %v222 = vld [vmem:[%s187 + $0x2] sm:$0x3]
        %v223 = vld [vmem:[%s187 + $0x4] sm:$0x3]
        %v224 = vld [vmem:[%s187 + $0x6] sm:$0x3]
        %v225 = vld [vmem:[%s196] sm:$0x3]
        %v226 = vld [vmem:[%s196 + $0x2] sm:$0x3]
        %v227 = vld [vmem:[%s196 + $0x4] sm:$0x3]
        %v228 = vld [vmem:[%s196 + $0x6] sm:$0x3]
        %vm229 = vcmask 1041408
        %v230 = vsel %vm229, %v221, -inf
        %v231 = vsel %vm229, %v222, -inf
        %v232 = vsel %vm229, %v223, -inf
        %v233 = vsel %vm229, %v224, -inf
        %v234 = vmax.f32 %v230, %v231
        %v235 = vmax.f32 %v232, %v233
        %v236 = vmax.f32 %v234, %v235
        %v237 = vsub.f32 %v221, %v236
        %v238 = vsub.f32 %v222, %v236
        %v239 = vsub.f32 %v223, %v236
        %v240 = vsub.f32 %v224, %v236
        %v241 = vmul.f32 %v237, 1.442695
        %v242 = vpow.pop %v241
        %v243 = vmul.f32 %v238, 1.442695
        %v244 = vpow.pop %v243
        %v245 = vmul.f32 %v239, 1.442695
        %v246 = vpow.pop %v245
        %v247 = vmul.f32 %v240, 1.442695
        %v248 = vpow.pop %v247
        %v249 = vsel %vm229, %v242, 0.0
        %v250 = vsel %vm229, %v244, 0.0
        %v251 = vadd.f32 %v249, %v250
        %v252 = vsel %vm229, %v246, 0.0
        %v253 = vadd.f32 %v251, %v252
        %v254 = vsel %vm229, %v248, 0.0
        %v255 = vadd.f32 %v253, %v254
        %v256 = vlog2.pop %v255
        %v257 = vmul.f32 %v256, 0.6931472
        %v258 = vsel %vm229, %v225, -inf
        %v259 = vsel %vm229, %v226, -inf
        %v260 = vsel %vm229, %v227, -inf
        %v261 = vsel %vm229, %v228, -inf
        %v262 = vmax.f32 %v258, %v259
        %v263 = vmax.f32 %v260, %v261
        %v264 = vmax.f32 %v262, %v263
        %v265 = vsub.f32 %v225, %v264
        %v266 = vsub.f32 %v226, %v264
        %v267 = vsub.f32 %v227, %v264
        %v268 = vsub.f32 %v228, %v264
        %v269 = vmul.f32 %v265, 1.442695
        %v270 = vpow.pop %v269
        %v271 = vmul.f32 %v266, 1.442695
        %v272 = vpow.pop %v271
        %v273 = vmul.f32 %v267, 1.442695
        %v274 = vpow.pop %v273
        %v275 = vmul.f32 %v268, 1.442695
        %v276 = vpow.pop %v275
        %v277 = vsel %vm229, %v270, 0.0
        %v278 = vsel %vm229, %v272, 0.0
        %v279 = vadd.f32 %v277, %v278
        %v280 = vsel %vm229, %v274, 0.0
        %v281 = vadd.f32 %v279, %v280
        %v282 = vsel %vm229, %v276, 0.0
        %v283 = vadd.f32 %v281, %v282
        %v284 = vmul.f32 %v270, %v237
        %v285 = vmul.f32 %v272, %v238
        %v286 = vmul.f32 %v274, %v239
        %v287 = vmul.f32 %v276, %v240
        %v288 = vsel %vm229, %v284, 0.0
        %v289 = vsel %vm229, %v285, 0.0
        %v290 = vadd.f32 %v288, %v289
        %v291 = vsel %vm229, %v286, 0.0
        %v292 = vadd.f32 %v290, %v291
        %v293 = vsel %vm229, %v287, 0.0
        %v294 = vadd.f32 %v292, %v293
        %v295 = vrcp.pop %v283
        %v296 = vmul.f32 %v294, %v295
        %v297 = vsub.f32 %v257, %v296
        %v298 = vsel %vm229, %v297, 0.0
        %v299 = vrot.slane %v298, 4
        %v300 = vadd.f32 %v298, %v299
        %v301 = vrot.slane %v300, 2
        %v302 = vadd.f32 %v300, %v301
        %v303 = vrot.slane %v302, 1
        %v304 = vadd.f32 %v302, %v303
        %305 = vst [vmem:[%s220] sm:$0x1] %v304
        %s306 = sand.u32 %s100, 1
        %s307 = scalar_lea.sflag [#allocation4], %s306
        %s308 = sand.u32 %s100, 1
        %s309 = scalar_lea.vmem [#allocation7], %s308
        // Predicated region
        $region37: #{tpu_custom_call.1} parent=27 // pred_check
          %p310 = pneg %p110
        $region38: #{tpu_custom_call.1} parent=27 // pred_check_branch
          %312 = sbr.rel (%p310) target = $region40
        $region39: #{tpu_custom_call.1} parent=27 // pred_region
          %s314 = ssub.s32 16, 16
          %315 = vsyncadd %s307, %s314
          %s316 = sadd.s32 %s27, %s26
          %s317 = smul.addr %s316, 16
          %s318 = scalar_lea.hbm %s2, %s317
          %s320 = sshll.u32 %s309, 4
          %s321 = int_to_ptr.vmem [resolvable:$true] %s320
          %323 = dma.vmem_to_hbm [thread:$0]  %s321, 16, %s318, %s307
        $region40: #{tpu_custom_call.1} parent=27 // pred_fallthru
          _
      $region28: #{tpu_custom_call.1} parent=5 // pred_fallthru
        _
      %p324 = scmp.le.s32.totalorder 2, %s17
      // Predicated region
      $region41: #{tpu_custom_call.1} parent=5 // pred_check
        %p325 = pneg %p324
      $region42: #{tpu_custom_call.1} parent=5 // pred_check_branch
        %327 = sbr.rel (%p325) target = $region44
      $region43: #{tpu_custom_call.1} parent=5 // pred_region
        %s328 = ssub.s32 %s17, 2
        // Predicated region
        $region45: #{tpu_custom_call.1} parent=43 // pred_check
          %p329 = pneg %p116
        $region46: #{tpu_custom_call.1} parent=43 // pred_check_branch
          %331 = sbr.rel (%p329) target = $region48
        $region47: #{tpu_custom_call.1} parent=43 // pred_region
          %s332 = sand.u32 %s101, 1
          %s333 = scalar_lea.sflag [#allocation4], %s332
          %s334 = sand.u32 %s101, 1
          %s335 = scalar_lea.vmem [#allocation7], %s334
          %336 = dma.done %s333, 16
        $region48: #{tpu_custom_call.1} parent=43 // pred_fallthru
          _
      $region44: #{tpu_custom_call.1} parent=5 // pred_fallthru
        _
    $region6: #{tpu_custom_call.1} parent=1 // loop_footer
      %s21 = sadd.s32 1, %s17
    $region7: #{tpu_custom_call.1} parent=1 // loop_footer_branch
      %16 = sbr.rel target = $region3
    $region8: #{tpu_custom_call.1} parent=1 // loop_exit
      _
    %337 = vsyncpa [#allocation3], 1
    %s338 = scalar_lea.sflag [#allocation3], 1
    %339 = vsyncpa %s338, 1
    %340 = vsyncpa [#allocation6], 1
    %s341 = scalar_lea.sflag [#allocation6], 1
    %342 = vsyncpa %s341, 1
    %343 = vsyncpa [#allocation4], 1
    %s344 = scalar_lea.sflag [#allocation4], 1
    %345 = vsyncpa %s344, 1

</llo_original>
